<compile_context>
chip_gen: v7x
topology: tpu7x:2x2x1
jax: 0.10.0
libtpu: 0.0.40
codegen_flags: <defaults>
</compile_context>

<pallas_src>
import math
import functools

import jax
import jax.numpy as jnp
from jax.experimental import pallas as pl
from jax.experimental.pallas import tpu as pltpu


# ------------------------------ helpers -------------------------------------

def _vmem_capacity_bytes(default=64 * 1024 * 1024):
    """Physical VMEM capacity (per core); conservative fallback if unavailable."""
    try:
        return int(pltpu.get_tpu_info().vmem_capacity_bytes)
    except Exception:  # older jax / interpret mode / query unavailable
        return default


def _vmem_limit_bytes():
    cap = _vmem_capacity_bytes()
    return max(32 * 1024 * 1024, min(int(cap * 0.85), 112 * 1024 * 1024))


def _pair_q_block(n_res, target):
    """Largest multiple-of-8 divisor of n_res that is <= target (or n_res itself)."""
    if n_res <= target:
        return n_res
    best = 0
    for b in range(8, min(target, n_res) + 1, 8):
        if n_res % b == 0:
            best = b
    if best == 0:
        raise ValueError(
            f"pair_bias: N_res={n_res} has no divisor <= {target} that is a multiple"
            " of 8; pad N_res to a multiple of 8 before calling this kernel.")
    return best


# ------------------------- pair-bias Pallas kernel ---------------------------

def _pair_bias_kernel(z_ref, lnz_ref, wzt_ref, b_ref):
    # z_ref  : (tq, N_res, c_z)
    # lnz_ref: (2, c_z)   row 0 = gamma, row 1 = beta
    # wzt_ref: (H, c_z)   transposed linear_z weight
    # b_ref  : (H, tq, N_res)  head-major, lane dim = N_res (lane-dense stores)
    z = z_ref[...].astype(jnp.float32)
    lnz = lnz_ref[...]
    gamma = lnz[0:1, :]
    beta = lnz[1:2, :]
    mean = jnp.mean(z, axis=-1, keepdims=True)
    var = jnp.mean((z - mean) ** 2, axis=-1, keepdims=True)
    zn = (z - mean) * jax.lax.rsqrt(var + 1e-5) * gamma + beta     # (tq, N_res, c_z)

    n_head = b_ref.shape[0]
    # TODO(synk): switch this VPU broadcast-mul + lane reduce to one MXU matmul +
    #             pltpu.einshape if pair_bias ever stops being HBM-bound on reading z.
    for h in range(n_head):                                        # static unroll, H small
        b_ref[h] = jnp.sum(zn * wzt_ref[h:h + 1, :], axis=-1).astype(b_ref.dtype)


def pair_bias(z, gz, bz, wz, *, bias_dtype=jnp.bfloat16, q_block=None,
              vmem_limit_bytes=None):
    n_res, _, c_z = z.shape
    n_head = wz.shape[-1]
    cap = _vmem_capacity_bytes()
    if q_block is None:
        # z tile is tq * N_res * c_z * 4 B (double buffered) + f32 zn intermediate.
        q_block = 32 if cap <= 80 * 1024 * 1024 else 64
    if vmem_limit_bytes is None:
        vmem_limit_bytes = _vmem_limit_bytes()
    tq = _pair_q_block(n_res, q_block)

    lnz = jnp.stack([gz, bz], axis=0)                              # (2, c_z)
    wzt = wz.T                                                     # (H, c_z)
    return pl.pallas_call(
        _pair_bias_kernel,
        out_shape=jax.ShapeDtypeStruct((n_head, n_res, n_res), bias_dtype),
        grid=(n_res // tq,),
        in_specs=[
            pl.BlockSpec((tq, n_res, c_z), lambda i: (i, 0, 0)),
            pl.BlockSpec((2, c_z), lambda i: (0, 0)),
            pl.BlockSpec((n_head, c_z), lambda i: (0, 0)),
        ],
        out_specs=pl.BlockSpec((n_head, tq, n_res), lambda i: (0, i, 0)),
        compiler_params=pltpu.CompilerParams(
            dimension_semantics=("parallel",),
            vmem_limit_bytes=vmem_limit_bytes),
    )(z, lnz, wzt)


# ----------------------- row-attention Pallas kernel -------------------------

def _row_attn_kernel(m_ref, bias_ref, lnm_ref, wqkvg_ref, bg_ref, wo_ref, bo_ref,
                     out_ref, qkvg_sc, acc_sc, *, n_head, c, compute_dtype):
    # m_ref    : (rb, N_res, c_m)            current MSA row block (same across heads)
    # bias_ref : (1, N_res, N_res)           current head's pair bias (streamed)
    # lnm_ref  : (2, c_m)                    LN(m) gamma / beta
    # wqkvg_ref: (c_m, 4*H*c)                head-major packed [q|k|v|g] per head
    # bg_ref   : (1, 1, c)                   gate bias for current head
    # wo_ref   : (1, c, c_m)                 output-projection rows for current head
    # bo_ref   : (1, c_m)
    # qkvg_sc  : VMEM (H, rb*N_res, 4*c)     projection stash, computed at h == 0
    # acc_sc   : VMEM (rb*N_res, c_m) f32    output accumulator across heads
    rows, n_res, c_m = m_ref.shape
    r = rows * n_res
    h = pl.program_id(1)

    # -------- h == 0: LayerNorm(m) + ONE fused projection matmul, stash per head ----
    @pl.when(h == 0)
    def _project():
        m = m_ref[...].astype(jnp.float32).reshape(r, c_m)
        lnm = lnm_ref[...]
        mean = jnp.mean(m, axis=-1, keepdims=True)
        var = jnp.mean((m - mean) ** 2, axis=-1, keepdims=True)
        mln = (m - mean) * jax.lax.rsqrt(var + 1e-5) * lnm[0:1, :] + lnm[1:2, :]
        proj = jnp.dot(mln.astype(compute_dtype), wqkvg_ref[...],
                       preferred_element_type=compute_dtype)       # (r, 4*H*c)
        for hh in range(n_head):                                   # static repack
            qkvg_sc[hh] = proj[:, hh * 4 * c:(hh + 1) * 4 * c]
        acc_sc[...] = jnp.zeros_like(acc_sc)

    # ---------------- one head per grid step: QK^T, softmax, PV, gate ---------------
    slab = qkvg_sc[h]                                              # (r, 4*c)
    qh = slab[:, 0 * c:1 * c].reshape(rows, n_res, c)
    kh = slab[:, 1 * c:2 * c].reshape(rows, n_res, c)
    vh = slab[:, 2 * c:3 * c].reshape(rows, n_res, c)
    graw = slab[:, 3 * c:4 * c]                                    # (r, c)

    # Batched over MSA rows, contracting the head channel (no transposes).
    s = jnp.einsum("rqc,rkc->rqk", qh, kh,
                   preferred_element_type=jnp.float32)             # (rows, N_res, N_res)
    s = s + bias_ref[...].astype(jnp.float32)                      # bias upcast, bcast rows
    s = s - jnp.max(s, axis=-1, keepdims=True)
    p = jnp.exp(s)
    p = p * pl.reciprocal(jnp.sum(p, axis=-1, keepdims=True), approx=True)
    oh = jnp.einsum("rqk,rkc->rqc", p.astype(compute_dtype), vh,
                    preferred_element_type=jnp.float32)            # (rows, N_res, c) f32

    g = jax.nn.sigmoid(graw.astype(jnp.float32) + bg_ref[0])       # (r, c) f32
    og = (g * oh.reshape(r, c)).astype(compute_dtype)
    # Per-head output-projection contribution with the streamed Wo tile.
    # TODO(synk): a single fused K=H*c output projection would need a dynamic
    #             lane-offset scatter or a head transpose; with the head grid axis we
    #             use the accumulate-in-VMEM structure instead.
    acc_sc[...] += jnp.dot(og, wo_ref[0], preferred_element_type=jnp.float32)

    # -------- last head: add output bias and write the MSA row block out ------------
    @pl.when(h == pl.num_programs(1) - 1)
    def _finalize():
        out = acc_sc[...] + bo_ref[...]
        out_ref[...] = out.reshape(rows, n_res, c_m).astype(out_ref.dtype)


def msa_row_attention_with_pair_bias(m, z, params, *, c, n_head, rows_block=8,
                                     compute_dtype=jnp.bfloat16,
                                     bias_dtype=jnp.bfloat16):
    n_seq, n_res, c_m = m.shape
    hc = n_head * c
    cap = _vmem_capacity_bytes()
    vmem_limit = _vmem_limit_bytes()

    # Pair bias, head-major (H, N_res, N_res); bf16 by default (upcast at score add).
    bias = pair_bias(z, params["gz"], params["bz"], params["wz"],
                     bias_dtype=bias_dtype, vmem_limit_bytes=vmem_limit)

    # Fused Wq|Wk|Wv|Wg, packed head-major ([q|k|v|g] per head), 1/sqrt(c) folded
    # into Wq, cast to compute_dtype on the host (halves weight HBM traffic for bf16).
    scale = 1.0 / math.sqrt(c)
    w4 = jnp.stack([params["wq"] * scale, params["wk"], params["wv"], params["wg"]],
                   axis=0)                                          # (4, c_m, H*c)
    w4 = w4.reshape(4, c_m, n_head, c)
    wqkvg = jnp.transpose(w4, (1, 2, 0, 3)).reshape(c_m, 4 * hc).astype(compute_dtype)
    wo = params["wo"].reshape(n_head, c, c_m).astype(compute_dtype)  # per-head Wo tiles
    bg = params["bg"].reshape(n_head, 1, c)
    bo = params["bo"].reshape(1, c_m)
    lnm = jnp.stack([params["gm"], params["bm"]], axis=0)            # (2, c_m)

    # Generation-aware row block: smaller on 64 MiB-VMEM parts (v7x); keep >= 2 row
    # blocks so the "parallel" axis can shard across two TensorCores.
    rb_cap = 4 if cap <= 80 * 1024 * 1024 else rows_block
    rb = max(1, min(rows_block, rb_cap, max(1, n_seq // 2)))
    while n_seq % rb:
        rb -= 1

    kernel = functools.partial(_row_attn_kernel, n_head=n_head, c=c,
                               compute_dtype=compute_dtype)
    out = pl.pallas_call(
        kernel,
        out_shape=jax.ShapeDtypeStruct((n_seq, n_res, c_m), m.dtype),
        grid=(n_seq // rb, n_head),
        in_specs=[
            pl.BlockSpec((rb, n_res, c_m), lambda i, h: (i, 0, 0)),   # MSA row block
            pl.BlockSpec((1, n_res, n_res), lambda i, h: (h, 0, 0)),  # bias, per head
            pl.BlockSpec((2, c_m), lambda i, h: (0, 0)),              # LN(m) gamma/beta
            pl.BlockSpec((c_m, 4 * hc), lambda i, h: (0, 0)),         # fused Wq|Wk|Wv|Wg
            pl.BlockSpec((1, 1, c), lambda i, h: (h, 0, 0)),          # gate bias, per head
            pl.BlockSpec((1, c, c_m), lambda i, h: (h, 0, 0)),        # Wo tile, per head
            pl.BlockSpec((1, c_m), lambda i, h: (0, 0)),              # bo
        ],
        out_specs=pl.BlockSpec((rb, n_res, c_m), lambda i, h: (i, 0, 0)),
        scratch_shapes=[
            pltpu.VMEM((n_head, rb * n_res, 4 * c), compute_dtype),   # q|k|v|g stash
            pltpu.VMEM((rb * n_res, c_m), jnp.float32),               # output accumulator
        ],
        compiler_params=pltpu.CompilerParams(
            dimension_semantics=("parallel", "arbitrary"),
            vmem_limit_bytes=vmem_limit),
    )(m, bias, lnm, wqkvg, bg, wo, bo)
    return out


# ------------------------------ JAX reference --------------------------------

def reference(m, z, params, *, c, n_head):
    n_seq, n_res, c_m = m.shape

    def ln(x, g, b, eps=1e-5):
        mu = jnp.mean(x, axis=-1, keepdims=True)
        var = jnp.mean((x - mu) ** 2, axis=-1, keepdims=True)
        return (x - mu) / jnp.sqrt(var + eps) * g + b

    mln = ln(m, params["gm"], params["bm"])
    zln = ln(z, params["gz"], params["bz"])
    b = jnp.einsum("ijc,ch->ijh", zln, params["wz"])
    b = jnp.moveaxis(b, -1, -3)                                     # (H, N_res, N_res)

    def heads(x):
        return x.reshape(n_seq, n_res, n_head, c).transpose(0, 2, 1, 3)

    q = heads(mln @ params["wq"]) / math.sqrt(c)
    k = heads(mln @ params["wk"])
    v = heads(mln @ params["wv"])
    a = jnp.einsum("shqc,shkc->shqk", q, k) + b[None]
    a = jax.nn.softmax(a, axis=-1)
    o = jnp.einsum("shqk,shkc->shqc", a, v)
    o = o.transpose(0, 2, 1, 3).reshape(n_seq, n_res, n_head * c)
    g = jax.nn.sigmoid(mln @ params["wg"] + params["bg"])
    o = g * o
    return o @ params["wo"] + params["bo"]


# ----------------------------------- main -------------------------------------

if __name__ == "__main__":
    # Small shapes consistent with the module's forward.
    N_seq, N_res = 8, 16
    c_m, c_z = 32, 16
    c, N_head = 16, 2

    key = jax.random.PRNGKey(0)
    ks = jax.random.split(key, 14)

    m = jax.random.normal(ks[0], (N_seq, N_res, c_m), jnp.float32)
    z = jax.random.normal(ks[1], (N_res, N_res, c_z), jnp.float32)

    hc = N_head * c
    params = {
        # LayerNorm(c_m) / LayerNorm(c_z): affine params
        "gm": 1.0 + 0.1 * jax.random.normal(ks[2], (c_m,), jnp.float32),
        "bm": 0.1 * jax.random.normal(ks[3], (c_m,), jnp.float32),
        "gz": 1.0 + 0.1 * jax.random.normal(ks[4], (c_z,), jnp.float32),
        "bz": 0.1 * jax.random.normal(ks[5], (c_z,), jnp.float32),
        # linear_z: c_z -> N_head, bias=False
        "wz": 0.1 * jax.random.normal(ks[6], (c_z, N_head), jnp.float32),
        # MHA q/k/v embeddings: c_m -> N_head*c, no bias (AlphaFold convention)
        "wq": 0.1 * jax.random.normal(ks[7], (c_m, hc), jnp.float32),
        "wk": 0.1 * jax.random.normal(ks[8], (c_m, hc), jnp.float32),
        "wv": 0.1 * jax.random.normal(ks[9], (c_m, hc), jnp.float32),
        # gating linear: c_m -> N_head*c, with bias
        "wg": 0.1 * jax.random.normal(ks[10], (c_m, hc), jnp.float32),
        "bg": 0.1 * jax.random.normal(ks[11], (hc,), jnp.float32),
        # output linear: N_head*c -> c_m, with bias
        "wo": 0.1 * jax.random.normal(ks[12], (hc, c_m), jnp.float32),
        "bo": 0.1 * jax.random.normal(ks[13], (c_m,), jnp.float32),
    }

    # Production setting = defaults (compute_dtype=bias_dtype=bfloat16); the demo uses
    # float32 so the check against the f32 reference is tight.
    out = msa_row_attention_with_pair_bias(m, z, params, c=c, n_head=N_head,
                                           rows_block=8,
                                           compute_dtype=jnp.float32,
                                           bias_dtype=jnp.float32)
    out = jax.block_until_ready(out)

    ref = jax.block_until_ready(reference(m, z, params, c=c, n_head=N_head))
    max_diff = float(jnp.max(jnp.abs(out - ref)))
    if max_diff > 2e-2:
        raise AssertionError(f"kernel/reference mismatch, max abs diff = {max_diff}")

    print("KERNEL_OK")
</pallas_src>

<mosaic_0001>
module attributes {stable_mosaic.version = 11 : i64} {
  func.func @_pair_bias_kernel(%arg0: i32, %arg1: memref<16x16x16xf32, #tpu.memory_space<vmem>>, %arg2: memref<2x16xf32, #tpu.memory_space<vmem>>, %arg3: memref<2x16xf32, #tpu.memory_space<vmem>>, %arg4: memref<2x16x16xf32, #tpu.memory_space<vmem>>) attributes {dimension_semantics = [#tpu.dimension_semantics<parallel>], iteration_bounds = array<i64: 1>, scalar_prefetch = 0 : i64, scratch_operands = 0 : i64, tpu.core_type = #tpu.core_type<tc>, window_params = [{transform_indices = @transform_0, window_bounds = array<i64: 16, 16, 16>}, {pipeline_mode = #tpu.pipeline_mode<synchronous>, transform_indices = @transform_1, window_bounds = array<i64: 2, 16>}, {pipeline_mode = #tpu.pipeline_mode<synchronous>, transform_indices = @transform_2, window_bounds = array<i64: 2, 16>}, {transform_indices = @transform_3, window_bounds = array<i64: 2, 16, 16>}]} {
    %c0 = arith.constant 0 : index
    %c0_0 = arith.constant 0 : index
    %c0_1 = arith.constant 0 : index
    %0 = vector.load %arg1[%c0, %c0_0, %c0_1] : memref<16x16x16xf32, #tpu.memory_space<vmem>>, vector<16x16x16xf32>
    %c0_2 = arith.constant 0 : index
    %c0_3 = arith.constant 0 : index
    %1 = vector.load %arg2[%c0_2, %c0_3] : memref<2x16xf32, #tpu.memory_space<vmem>>, vector<2x16xf32>
    %2 = vector.extract_strided_slice %1 {offsets = [0, 0], sizes = [1, 16], strides = [1, 1]} : vector<2x16xf32> to vector<1x16xf32>
    %3 = vector.extract_strided_slice %1 {offsets = [1, 0], sizes = [1, 16], strides = [1, 1]} : vector<2x16xf32> to vector<1x16xf32>
    %cst = arith.constant dense<0.000000e+00> : vector<16x16xf32>
    %4 = vector.multi_reduction <add>, %0, %cst [2] : vector<16x16x16xf32> to vector<16x16xf32>
    %5 = vector.shape_cast %4 : vector<16x16xf32> to vector<16x16x1xf32>
    %cst_4 = arith.constant 1.600000e+01 : f32
    %6 = vector.broadcast %cst_4 : f32 to vector<16x16x1xf32>
    %7 = arith.divf %5, %6 : vector<16x16x1xf32>
    %8 = vector.broadcast %7 : vector<16x16x1xf32> to vector<16x16x16xf32>
    %9 = arith.subf %0, %8 : vector<16x16x16xf32>
    %10 = arith.mulf %9, %9 : vector<16x16x16xf32>
    %cst_5 = arith.constant dense<0.000000e+00> : vector<16x16xf32>
    %11 = vector.multi_reduction <add>, %10, %cst_5 [2] : vector<16x16x16xf32> to vector<16x16xf32>
    %12 = vector.shape_cast %11 : vector<16x16xf32> to vector<16x16x1xf32>
    %cst_6 = arith.constant 1.600000e+01 : f32
    %13 = vector.broadcast %cst_6 : f32 to vector<16x16x1xf32>
    %14 = arith.divf %12, %13 : vector<16x16x1xf32>
    %15 = vector.broadcast %7 : vector<16x16x1xf32> to vector<16x16x16xf32>
    %16 = arith.subf %0, %15 : vector<16x16x16xf32>
    %cst_7 = arith.constant 9.99999974E-6 : f32
    %17 = vector.broadcast %cst_7 : f32 to vector<16x16x1xf32>
    %18 = arith.addf %14, %17 : vector<16x16x1xf32>
    %19 = math.rsqrt %18 : vector<16x16x1xf32>
    %20 = vector.broadcast %19 : vector<16x16x1xf32> to vector<16x16x16xf32>
    %21 = arith.mulf %16, %20 : vector<16x16x16xf32>
    %22 = vector.shape_cast %2 : vector<1x16xf32> to vector<1x1x16xf32>
    %23 = vector.broadcast %22 : vector<1x1x16xf32> to vector<16x16x16xf32>
    %24 = arith.mulf %21, %23 : vector<16x16x16xf32>
    %25 = vector.shape_cast %3 : vector<1x16xf32> to vector<1x1x16xf32>
    %26 = vector.broadcast %25 : vector<1x1x16xf32> to vector<16x16x16xf32>
    %27 = arith.addf %24, %26 : vector<16x16x16xf32>
    %c0_8 = arith.constant 0 : index
    %c0_9 = arith.constant 0 : index
    %28 = vector.load %arg3[%c0_8, %c0_9] : memref<2x16xf32, #tpu.memory_space<vmem>>, vector<1x16xf32>
    %29 = vector.shape_cast %28 : vector<1x16xf32> to vector<1x1x16xf32>
    %30 = vector.broadcast %29 : vector<1x1x16xf32> to vector<16x16x16xf32>
    %31 = arith.mulf %27, %30 : vector<16x16x16xf32>
    %cst_10 = arith.constant dense<0.000000e+00> : vector<16x16xf32>
    %32 = vector.multi_reduction <add>, %31, %cst_10 [2] : vector<16x16x16xf32> to vector<16x16xf32>
    %c0_11 = arith.constant 0 : index
    %c0_12 = arith.constant 0 : index
    %c0_13 = arith.constant 0 : index
    %33 = vector.load %arg4[%c0_11, %c0_12, %c0_13] : memref<2x16x16xf32, #tpu.memory_space<vmem>>, vector<1x16x16xf32>
    %34 = vector.shape_cast %33 : vector<1x16x16xf32> to vector<16x16xf32>
    %35 = vector.shape_cast %32 : vector<16x16xf32> to vector<1x16x16xf32>
    tpu.vector_store %arg4[%c0_11, %c0_12, %c0_13], %35 {strides = array<i32>} : memref<2x16x16xf32, #tpu.memory_space<vmem>>, vector<1x16x16xf32>,
    %c1 = arith.constant 1 : index
    %c0_14 = arith.constant 0 : index
    %36 = vector.load %arg3[%c1, %c0_14] : memref<2x16xf32, #tpu.memory_space<vmem>>, vector<1x16xf32>
    %37 = vector.shape_cast %36 : vector<1x16xf32> to vector<1x1x16xf32>
    %38 = vector.broadcast %37 : vector<1x1x16xf32> to vector<16x16x16xf32>
    %39 = arith.mulf %27, %38 : vector<16x16x16xf32>
    %cst_15 = arith.constant dense<0.000000e+00> : vector<16x16xf32>
    %40 = vector.multi_reduction <add>, %39, %cst_15 [2] : vector<16x16x16xf32> to vector<16x16xf32>
    %c1_16 = arith.constant 1 : index
    %c0_17 = arith.constant 0 : index
    %c0_18 = arith.constant 0 : index
    %41 = vector.load %arg4[%c1_16, %c0_17, %c0_18] : memref<2x16x16xf32, #tpu.memory_space<vmem>>, vector<1x16x16xf32>
    %42 = vector.shape_cast %41 : vector<1x16x16xf32> to vector<16x16xf32>
    %43 = vector.shape_cast %40 : vector<16x16xf32> to vector<1x16x16xf32>
    tpu.vector_store %arg4[%c1_16, %c0_17, %c0_18], %43 {strides = array<i32>} : memref<2x16x16xf32, #tpu.memory_space<vmem>>, vector<1x16x16xf32>,
    return
  }
  func.func @transform_0(%arg0: i32) -> (i32, i32, i32) {
    %c0_i32 = arith.constant 0 : i32
    %c0_i32_0 = arith.constant 0 : i32
    %c0_i32_1 = arith.constant 0 : i32
    return %arg0, %c0_i32, %c0_i32_0 : i32, i32, i32
  }
  func.func @transform_1(%arg0: i32) -> (i32, i32) {
    %c0_i32 = arith.constant 0 : i32
    %c0_i32_0 = arith.constant 0 : i32
    %c0_i32_1 = arith.constant 0 : i32
    return %c0_i32, %c0_i32_0 : i32, i32
  }
  func.func @transform_2(%arg0: i32) -> (i32, i32) {
    %c0_i32 = arith.constant 0 : i32
    %c0_i32_0 = arith.constant 0 : i32
    %c0_i32_1 = arith.constant 0 : i32
    return %c0_i32, %c0_i32_0 : i32, i32
  }
  func.func @transform_3(%arg0: i32) -> (i32, i32, i32) {
    %c0_i32 = arith.constant 0 : i32
    %c0_i32_0 = arith.constant 0 : i32
    %c0_i32_1 = arith.constant 0 : i32
    return %c0_i32, %arg0, %c0_i32_0 : i32, i32, i32
  }
}

</mosaic_0001>

<llo_original>
// kernel: tpu_custom_call.1
$region0: #{tpu_custom_call.1}
  #allocation0 [shape = 'u32[]', space=smem, size = 0x4, offset = 0x4, fixed_abs, tag = 'smem constant byte address 0x4 - core index']
  #allocation1 [shape = 'u32[144,128]{1,0:T(1,128)}', space=vmem, size = 0x12000, scoped, tag = 'internal scratch']
  %s0 = inlined_call_operand.hbm [shape: f32[16,16,16], index: 0, kind: input, shape index: {}]
  %s1 = inlined_call_operand.vmem [shape: f32[2,16], index: 1, kind: input, shape index: {}]
  %s2 = inlined_call_operand.vmem [shape: f32[2,16], index: 2, kind: input, shape index: {}]
  %s3 = inlined_call_operand.hbm [shape: f32[2,16,16], index: 3, kind: output, shape index: {}]
  %s4 = sld [smem:[#allocation0]]
  $region26: #{tpu_custom_call.1} parent=0
    _
  %s6 = ssub.s32 1, %s4
  %s7 = scalar_select 0, %s6, %s4
  $region1: #{tpu_custom_call.1} parent=0
    #allocation2 [shape = 'u8[131072]{0}', space=vmem, size = 0x20000, scoped, tag = 'input window, operand 0, single buffered']
    #allocation3 [shape = 's32[1]{0}', space=sflag, size = 0x4, scoped, tag = 'scoped memory for tpu_custom_call.1']
    #allocation4 [shape = 's32[1]{0}', space=sflag, size = 0x4, scoped, tag = 'scoped memory for tpu_custom_call.1']
    #allocation5 [shape = 'u8[16384]{0}', space=vmem, size = 0x4000, scoped, tag = 'output window, operand 0, single buffered']
    %8 = vsyncpa [#allocation3], 0
    %9 = vsyncpa [#allocation4], 0
    // Predicated region
    $region2: #{tpu_custom_call.1} parent=1 // pred_check
      _
    $region3: #{tpu_custom_call.1} parent=1 // pred_check_branch
      %11 = sbr.rel (0) target = $region5
    $region4: #{tpu_custom_call.1} parent=1 // pred_region
      %s13 = ssub.s32 4096, 4096
      %14 = vsyncadd [#allocation3], %s13
      %s15 = sshll.u32 [#allocation2], 4
      %s16 = int_to_ptr.vmem [resolvable:$true] %s15
      %21 = dma.hbm_to_vmem [thread:$0]  %s0, 4096, %s16, [#allocation3], 128, 128, 8
    $region5: #{tpu_custom_call.1} parent=1 // pred_fallthru
      _
    // Predicated region
    $region6: #{tpu_custom_call.1} parent=1 // pred_check
      _
    $region7: #{tpu_custom_call.1} parent=1 // pred_check_branch
      %23 = sbr.rel (0) target = $region9
    $region8: #{tpu_custom_call.1} parent=1 // pred_region
      _
    $region9: #{tpu_custom_call.1} parent=1 // pred_fallthru
      _
    // Predicated region
    $region10: #{tpu_custom_call.1} parent=1 // pred_check
      _
    $region11: #{tpu_custom_call.1} parent=1 // pred_check_branch
      %25 = sbr.rel (0) target = $region13
    $region12: #{tpu_custom_call.1} parent=1 // pred_region
      _
    $region13: #{tpu_custom_call.1} parent=1 // pred_fallthru
      _
    // Predicated region
    $region14: #{tpu_custom_call.1} parent=1 // pred_check
      _
    $region15: #{tpu_custom_call.1} parent=1 // pred_check_branch
      %27 = sbr.rel (0) target = $region17
    $region16: #{tpu_custom_call.1} parent=1 // pred_region
      %28 = dma.done [#allocation3], 4096
    $region17: #{tpu_custom_call.1} parent=1 // pred_fallthru
      _
    %v29 = vld [vmem:[#allocation2] sm:$0xff]
    %v30 = vld [vmem:[#allocation2 + $0x8] sm:$0xff]
    %v31 = vld [vmem:[#allocation2 + $0x10] sm:$0xff]
    %v32 = vld [vmem:[#allocation2 + $0x18] sm:$0xff]
    %v33 = vld [vmem:[#allocation2 + $0x20] sm:$0xff]
    %v34 = vld [vmem:[#allocation2 + $0x28] sm:$0xff]
    %v35 = vld [vmem:[#allocation2 + $0x30] sm:$0xff]
    %v36 = vld [vmem:[#allocation2 + $0x38] sm:$0xff]
    %v37 = vld [vmem:[#allocation2 + $0x40] sm:$0xff]
    %v38 = vld [vmem:[#allocation2 + $0x48] sm:$0xff]
    %v39 = vld [vmem:[#allocation2 + $0x50] sm:$0xff]
    %v40 = vld [vmem:[#allocation2 + $0x58] sm:$0xff]
    %v41 = vld [vmem:[#allocation2 + $0x60] sm:$0xff]
    %v42 = vld [vmem:[#allocation2 + $0x68] sm:$0xff]
    %v43 = vld [vmem:[#allocation2 + $0x70] sm:$0xff]
    %v44 = vld [vmem:[#allocation2 + $0x78] sm:$0xff]
    %v45 = vld [vmem:[#allocation2 + $0x80] sm:$0xff]
    %v46 = vld [vmem:[#allocation2 + $0x88] sm:$0xff]
    %v47 = vld [vmem:[#allocation2 + $0x90] sm:$0xff]
    %v48 = vld [vmem:[#allocation2 + $0x98] sm:$0xff]
    %v49 = vld [vmem:[#allocation2 + $0xa0] sm:$0xff]
    %v50 = vld [vmem:[#allocation2 + $0xa8] sm:$0xff]
    %v51 = vld [vmem:[#allocation2 + $0xb0] sm:$0xff]
    %v52 = vld [vmem:[#allocation2 + $0xb8] sm:$0xff]
    %v53 = vld [vmem:[#allocation2 + $0xc0] sm:$0xff]
    %v54 = vld [vmem:[#allocation2 + $0xc8] sm:$0xff]
    %v55 = vld [vmem:[#allocation2 + $0xd0] sm:$0xff]
    %v56 = vld [vmem:[#allocation2 + $0xd8] sm:$0xff]
    %v57 = vld [vmem:[#allocation2 + $0xe0] sm:$0xff]
    %v58 = vld [vmem:[#allocation2 + $0xe8] sm:$0xff]
    %v59 = vld [vmem:[#allocation2 + $0xf0] sm:$0xff]
    %v60 = vld [vmem:[#allocation2 + $0xf8] sm:$0xff]
    %v61 = vld [vmem:[%s1] sm:$0x3]
    %vm62 = vcmask 130048
    %v63 = vsel %vm62, %v29, 0.0
    %64 = vadd.xlane.f32.xlu0 %v63
    %v65 = vpop.xlane.xlu0 %64
    %v66 = vsel %vm62, %v30, 0.0
    %67 = vadd.xlane.f32.xlu0 %v66
    %v68 = vpop.xlane.xlu0 %67
    %v69 = vsel %vm62, %v31, 0.0
    %70 = vadd.xlane.f32.xlu0 %v69
    %v71 = vpop.xlane.xlu0 %70
    %v72 = vsel %vm62, %v32, 0.0
    %73 = vadd.xlane.f32.xlu0 %v72
    %v74 = vpop.xlane.xlu0 %73
    %v75 = vsel %vm62, %v33, 0.0
    %76 = vadd.xlane.f32.xlu0 %v75
    %v77 = vpop.xlane.xlu0 %76
    %v78 = vsel %vm62, %v34, 0.0
    %79 = vadd.xlane.f32.xlu0 %v78
    %v80 = vpop.xlane.xlu0 %79
    %v81 = vsel %vm62, %v35, 0.0
    %82 = vadd.xlane.f32.xlu0 %v81
    %v83 = vpop.xlane.xlu0 %82
    %v84 = vsel %vm62, %v36, 0.0
    %85 = vadd.xlane.f32.xlu0 %v84
    %v86 = vpop.xlane.xlu0 %85
    %v87 = vsel %vm62, %v37, 0.0
    %88 = vadd.xlane.f32.xlu0 %v87
    %v89 = vpop.xlane.xlu0 %88
    %v90 = vsel %vm62, %v38, 0.0
    %91 = vadd.xlane.f32.xlu0 %v90
    %v92 = vpop.xlane.xlu0 %91
    %v93 = vsel %vm62, %v39, 0.0
    %94 = vadd.xlane.f32.xlu0 %v93
    %v95 = vpop.xlane.xlu0 %94
    %v96 = vsel %vm62, %v40, 0.0
    %97 = vadd.xlane.f32.xlu0 %v96
    %v98 = vpop.xlane.xlu0 %97
    %v99 = vsel %vm62, %v41, 0.0
    %100 = vadd.xlane.f32.xlu0 %v99
    %v101 = vpop.xlane.xlu0 %100
    %v102 = vsel %vm62, %v42, 0.0
    %103 = vadd.xlane.f32.xlu0 %v102
    %v104 = vpop.xlane.xlu0 %103
    %v105 = vsel %vm62, %v43, 0.0
    %106 = vadd.xlane.f32.xlu0 %v105
    %v107 = vpop.xlane.xlu0 %106
    %v108 = vsel %vm62, %v44, 0.0
    %109 = vadd.xlane.f32.xlu0 %v108
    %v110 = vpop.xlane.xlu0 %109
    %v111 = vsel %vm62, %v45, 0.0
    %112 = vadd.xlane.f32.xlu0 %v111
    %v113 = vpop.xlane.xlu0 %112
    %v114 = vsel %vm62, %v46, 0.0
    %115 = vadd.xlane.f32.xlu0 %v114
    %v116 = vpop.xlane.xlu0 %115
    %v117 = vsel %vm62, %v47, 0.0
    %118 = vadd.xlane.f32.xlu0 %v117
    %v119 = vpop.xlane.xlu0 %118
    %v120 = vsel %vm62, %v48, 0.0
    %121 = vadd.xlane.f32.xlu0 %v120
    %v122 = vpop.xlane.xlu0 %121
    %v123 = vsel %vm62, %v49, 0.0
    %124 = vadd.xlane.f32.xlu0 %v123
    %v125 = vpop.xlane.xlu0 %124
    %v126 = vsel %vm62, %v50, 0.0
    %127 = vadd.xlane.f32.xlu0 %v126
    %v128 = vpop.xlane.xlu0 %127
    %v129 = vsel %vm62, %v51, 0.0
    %130 = vadd.xlane.f32.xlu0 %v129
    %v131 = vpop.xlane.xlu0 %130
    %v132 = vsel %vm62, %v52, 0.0
    %133 = vadd.xlane.f32.xlu0 %v132
    %v134 = vpop.xlane.xlu0 %133
    %v135 = vsel %vm62, %v53, 0.0
    %136 = vadd.xlane.f32.xlu0 %v135
    %v137 = vpop.xlane.xlu0 %136
    %v138 = vsel %vm62, %v54, 0.0
    %139 = vadd.xlane.f32.xlu0 %v138
    %v140 = vpop.xlane.xlu0 %139
    %v141 = vsel %vm62, %v55, 0.0
    %142 = vadd.xlane.f32.xlu0 %v141
    %v143 = vpop.xlane.xlu0 %142
    %v144 = vsel %vm62, %v56, 0.0
    %145 = vadd.xlane.f32.xlu0 %v144
    %v146 = vpop.xlane.xlu0 %145
    %v147 = vsel %vm62, %v57, 0.0
    %148 = vadd.xlane.f32.xlu0 %v147
    %v149 = vpop.xlane.xlu0 %148
    %v150 = vsel %vm62, %v58, 0.0
    %151 = vadd.xlane.f32.xlu0 %v150
    %v152 = vpop.xlane.xlu0 %151
    %v153 = vsel %vm62, %v59, 0.0
    %154 = vadd.xlane.f32.xlu0 %v153
    %v155 = vpop.xlane.xlu0 %154
    %v156 = vsel %vm62, %v60, 0.0
    %157 = vadd.xlane.f32.xlu0 %v156
    %v158 = vpop.xlane.xlu0 %157
    %v159 = vrcp.pop 16.0
    %v160 = vmul.f32 %v65, %v159
    %v161 = vmul.f32 %v68, %v159
    %v162 = vmul.f32 %v71, %v159
    %v163 = vmul.f32 %v74, %v159
    %v164 = vmul.f32 %v77, %v159
    %v165 = vmul.f32 %v80, %v159
    %v166 = vmul.f32 %v83, %v159
    %v167 = vmul.f32 %v86, %v159
    %v168 = vmul.f32 %v89, %v159
    %v169 = vmul.f32 %v92, %v159
    %v170 = vmul.f32 %v95, %v159
    %v171 = vmul.f32 %v98, %v159
    %v172 = vmul.f32 %v101, %v159
    %v173 = vmul.f32 %v104, %v159
    %v174 = vmul.f32 %v107, %v159
    %v175 = vmul.f32 %v110, %v159
    %v176 = vmul.f32 %v113, %v159
    %v177 = vmul.f32 %v116, %v159
    %v178 = vmul.f32 %v119, %v159
    %v179 = vmul.f32 %v122, %v159
    %v180 = vmul.f32 %v125, %v159
    %v181 = vmul.f32 %v128, %v159
    %v182 = vmul.f32 %v131, %v159
    %v183 = vmul.f32 %v134, %v159
    %v184 = vmul.f32 %v137, %v159
    %v185 = vmul.f32 %v140, %v159
    %v186 = vmul.f32 %v143, %v159
    %v187 = vmul.f32 %v146, %v159
    %v188 = vmul.f32 %v149, %v159
    %v189 = vmul.f32 %v152, %v159
    %v190 = vmul.f32 %v155, %v159
    %v191 = vmul.f32 %v158, %v159
    %v192 = vsub.f32 %v29, %v160
    %v193 = vsub.f32 %v30, %v161
    %v194 = vsub.f32 %v31, %v162
    %v195 = vsub.f32 %v32, %v163
    %v196 = vsub.f32 %v33, %v164
    %v197 = vsub.f32 %v34, %v165
    %v198 = vsub.f32 %v35, %v166
    %v199 = vsub.f32 %v36, %v167
    %v200 = vsub.f32 %v37, %v168
    %v201 = vsub.f32 %v38, %v169
    %v202 = vsub.f32 %v39, %v170
    %v203 = vsub.f32 %v40, %v171
    %v204 = vsub.f32 %v41, %v172
    %v205 = vsub.f32 %v42, %v173
    %v206 = vsub.f32 %v43, %v174
    %v207 = vsub.f32 %v44, %v175
    %v208 = vsub.f32 %v45, %v176
    %v209 = vsub.f32 %v46, %v177
    %v210 = vsub.f32 %v47, %v178
    %v211 = vsub.f32 %v48, %v179
    %v212 = vsub.f32 %v49, %v180
    %v213 = vsub.f32 %v50, %v181
    %v214 = vsub.f32 %v51, %v182
    %v215 = vsub.f32 %v52, %v183
    %v216 = vsub.f32 %v53, %v184
    %v217 = vsub.f32 %v54, %v185
    %v218 = vsub.f32 %v55, %v186
    %v219 = vsub.f32 %v56, %v187
    %v220 = vsub.f32 %v57, %v188
    %v221 = vsub.f32 %v58, %v189
    %v222 = vsub.f32 %v59, %v190
    %v223 = vsub.f32 %v60, %v191
    %v224 = vmul.f32 %v192, %v192
    %v225 = vmul.f32 %v193, %v193
    %v226 = vmul.f32 %v194, %v194
    %v227 = vmul.f32 %v195, %v195
    %v228 = vmul.f32 %v196, %v196
    %v229 = vmul.f32 %v197, %v197
    %v230 = vmul.f32 %v198, %v198
    %v231 = vmul.f32 %v199, %v199
    %v232 = vmul.f32 %v200, %v200
    %v233 = vmul.f32 %v201, %v201
    %v234 = vmul.f32 %v202, %v202
    %v235 = vmul.f32 %v203, %v203
    %v236 = vmul.f32 %v204, %v204
    %v237 = vmul.f32 %v205, %v205
    %v238 = vmul.f32 %v206, %v206
    %v239 = vmul.f32 %v207, %v207
    %v240 = vmul.f32 %v208, %v208
    %v241 = vmul.f32 %v209, %v209
    %v242 = vmul.f32 %v210, %v210
    %v243 = vmul.f32 %v211, %v211
    %v244 = vmul.f32 %v212, %v212
    %v245 = vmul.f32 %v213, %v213
    %v246 = vmul.f32 %v214, %v214
    %v247 = vmul.f32 %v215, %v215
    %v248 = vmul.f32 %v216, %v216
    %v249 = vmul.f32 %v217, %v217
    %v250 = vmul.f32 %v218, %v218
    %v251 = vmul.f32 %v219, %v219
    %v252 = vmul.f32 %v220, %v220
    %v253 = vmul.f32 %v221, %v221
    %v254 = vmul.f32 %v222, %v222
    %v255 = vmul.f32 %v223, %v223
    %v256 = vsel %vm62, %v224, 0.0
    %257 = vadd.xlane.f32.xlu0 %v256
    %v258 = vpop.xlane.xlu0 %257
    %v259 = vsel %vm62, %v225, 0.0
    %260 = vadd.xlane.f32.xlu0 %v259
    %v261 = vpop.xlane.xlu0 %260
    %v262 = vsel %vm62, %v226, 0.0
    %263 = vadd.xlane.f32.xlu0 %v262
    %v264 = vpop.xlane.xlu0 %263
    %v265 = vsel %vm62, %v227, 0.0
    %266 = vadd.xlane.f32.xlu0 %v265
    %v267 = vpop.xlane.xlu0 %266
    %v268 = vsel %vm62, %v228, 0.0
    %269 = vadd.xlane.f32.xlu0 %v268
    %v270 = vpop.xlane.xlu0 %269
    %v271 = vsel %vm62, %v229, 0.0
    %272 = vadd.xlane.f32.xlu0 %v271
    %v273 = vpop.xlane.xlu0 %272
    %v274 = vsel %vm62, %v230, 0.0
    %275 = vadd.xlane.f32.xlu0 %v274
    %v276 = vpop.xlane.xlu0 %275
    %v277 = vsel %vm62, %v231, 0.0
    %278 = vadd.xlane.f32.xlu0 %v277
    %v279 = vpop.xlane.xlu0 %278
    %v280 = vsel %vm62, %v232, 0.0
    %281 = vadd.xlane.f32.xlu0 %v280
    %v282 = vpop.xlane.xlu0 %281
    %v283 = vsel %vm62, %v233, 0.0
    %284 = vadd.xlane.f32.xlu0 %v283
    %v285 = vpop.xlane.xlu0 %284
    %v286 = vsel %vm62, %v234, 0.0
    %287 = vadd.xlane.f32.xlu0 %v286
    %v288 = vpop.xlane.xlu0 %287
    %v289 = vsel %vm62, %v235, 0.0
    %290 = vadd.xlane.f32.xlu0 %v289
    %v291 = vpop.xlane.xlu0 %290
    %v292 = vsel %vm62, %v236, 0.0
    %293 = vadd.xlane.f32.xlu0 %v292
    %v294 = vpop.xlane.xlu0 %293
    %v295 = vsel %vm62, %v237, 0.0
    %296 = vadd.xlane.f32.xlu0 %v295
    %v297 = vpop.xlane.xlu0 %296
    %v298 = vsel %vm62, %v238, 0.0
    %299 = vadd.xlane.f32.xlu0 %v298
    %v300 = vpop.xlane.xlu0 %299
    %v301 = vsel %vm62, %v239, 0.0
    %302 = vadd.xlane.f32.xlu0 %v301
    %v303 = vpop.xlane.xlu0 %302
    %v304 = vsel %vm62, %v240, 0.0
    %305 = vadd.xlane.f32.xlu0 %v304
    %v306 = vpop.xlane.xlu0 %305
    %v307 = vsel %vm62, %v241, 0.0
    %308 = vadd.xlane.f32.xlu0 %v307
    %v309 = vpop.xlane.xlu0 %308
    %v310 = vsel %vm62, %v242, 0.0
    %311 = vadd.xlane.f32.xlu0 %v310
    %v312 = vpop.xlane.xlu0 %311
    %v313 = vsel %vm62, %v243, 0.0
    %314 = vadd.xlane.f32.xlu0 %v313
    %v315 = vpop.xlane.xlu0 %314
    %v316 = vsel %vm62, %v244, 0.0
    %317 = vadd.xlane.f32.xlu0 %v316
    %v318 = vpop.xlane.xlu0 %317
    %v319 = vsel %vm62, %v245, 0.0
    %320 = vadd.xlane.f32.xlu0 %v319
    %v321 = vpop.xlane.xlu0 %320
    %v322 = vsel %vm62, %v246, 0.0
    %323 = vadd.xlane.f32.xlu0 %v322
    %v324 = vpop.xlane.xlu0 %323
    %v325 = vsel %vm62, %v247, 0.0
    %326 = vadd.xlane.f32.xlu0 %v325
    %v327 = vpop.xlane.xlu0 %326
    %v328 = vsel %vm62, %v248, 0.0
    %329 = vadd.xlane.f32.xlu0 %v328
    %v330 = vpop.xlane.xlu0 %329
    %v331 = vsel %vm62, %v249, 0.0
    %332 = vadd.xlane.f32.xlu0 %v331
    %v333 = vpop.xlane.xlu0 %332
    %v334 = vsel %vm62, %v250, 0.0
    %335 = vadd.xlane.f32.xlu0 %v334
    %v336 = vpop.xlane.xlu0 %335
    %v337 = vsel %vm62, %v251, 0.0
    %338 = vadd.xlane.f32.xlu0 %v337
    %v339 = vpop.xlane.xlu0 %338
    %v340 = vsel %vm62, %v252, 0.0
    %341 = vadd.xlane.f32.xlu0 %v340
    %v342 = vpop.xlane.xlu0 %341
    %v343 = vsel %vm62, %v253, 0.0
    %344 = vadd.xlane.f32.xlu0 %v343
    %v345 = vpop.xlane.xlu0 %344
    %v346 = vsel %vm62, %v254, 0.0
    %347 = vadd.xlane.f32.xlu0 %v346
    %v348 = vpop.xlane.xlu0 %347
    %v349 = vsel %vm62, %v255, 0.0
    %350 = vadd.xlane.f32.xlu0 %v349
    %v351 = vpop.xlane.xlu0 %350
    %v352 = vmul.f32 %v258, %v159
    %v353 = vmul.f32 %v261, %v159
    %v354 = vmul.f32 %v264, %v159
    %v355 = vmul.f32 %v267, %v159
    %v356 = vmul.f32 %v270, %v159
    %v357 = vmul.f32 %v273, %v159
    %v358 = vmul.f32 %v276, %v159
    %v359 = vmul.f32 %v279, %v159
    %v360 = vmul.f32 %v282, %v159
    %v361 = vmul.f32 %v285, %v159
    %v362 = vmul.f32 %v288, %v159
    %v363 = vmul.f32 %v291, %v159
    %v364 = vmul.f32 %v294, %v159
    %v365 = vmul.f32 %v297, %v159
    %v366 = vmul.f32 %v300, %v159
    %v367 = vmul.f32 %v303, %v159
    %v368 = vmul.f32 %v306, %v159
    %v369 = vmul.f32 %v309, %v159
    %v370 = vmul.f32 %v312, %v159
    %v371 = vmul.f32 %v315, %v159
    %v372 = vmul.f32 %v318, %v159
    %v373 = vmul.f32 %v321, %v159
    %v374 = vmul.f32 %v324, %v159
    %v375 = vmul.f32 %v327, %v159
    %v376 = vmul.f32 %v330, %v159
    %v377 = vmul.f32 %v333, %v159
    %v378 = vmul.f32 %v336, %v159
    %v379 = vmul.f32 %v339, %v159
    %v380 = vmul.f32 %v342, %v159
    %v381 = vmul.f32 %v345, %v159
    %v382 = vmul.f32 %v348, %v159
    %v383 = vmul.f32 %v351, %v159
    %v384 = vadd.f32 %v352, 1e-05
    %v385 = vadd.f32 %v353, 1e-05
    %v386 = vadd.f32 %v354, 1e-05
    %v387 = vadd.f32 %v355, 1e-05
    %v388 = vadd.f32 %v356, 1e-05
    %v389 = vadd.f32 %v357, 1e-05
    %v390 = vadd.f32 %v358, 1e-05
    %v391 = vadd.f32 %v359, 1e-05
    %v392 = vadd.f32 %v360, 1e-05
    %v393 = vadd.f32 %v361, 1e-05
    %v394 = vadd.f32 %v362, 1e-05
    %v395 = vadd.f32 %v363, 1e-05
    %v396 = vadd.f32 %v364, 1e-05
    %v397 = vadd.f32 %v365, 1e-05
    %v398 = vadd.f32 %v366, 1e-05
    %v399 = vadd.f32 %v367, 1e-05
    %v400 = vadd.f32 %v368, 1e-05
    %v401 = vadd.f32 %v369, 1e-05
    %v402 = vadd.f32 %v370, 1e-05
    %v403 = vadd.f32 %v371, 1e-05
    %v404 = vadd.f32 %v372, 1e-05
    %v405 = vadd.f32 %v373, 1e-05
    %v406 = vadd.f32 %v374, 1e-05
    %v407 = vadd.f32 %v375, 1e-05
    %v408 = vadd.f32 %v376, 1e-05
    %v409 = vadd.f32 %v377, 1e-05
    %v410 = vadd.f32 %v378, 1e-05
    %v411 = vadd.f32 %v379, 1e-05
    %v412 = vadd.f32 %v380, 1e-05
    %v413 = vadd.f32 %v381, 1e-05
    %v414 = vadd.f32 %v382, 1e-05
    %v415 = vadd.f32 %v383, 1e-05
    %v416 = vrsqrt.pop %v384
    %v417 = vrsqrt.pop %v385
    %v418 = vrsqrt.pop %v386
    %v419 = vrsqrt.pop %v387
    %v420 = vrsqrt.pop %v388
    %v421 = vrsqrt.pop %v389
    %v422 = vrsqrt.pop %v390
    %v423 = vrsqrt.pop %v391
    %v424 = vrsqrt.pop %v392
    %v425 = vrsqrt.pop %v393
    %v426 = vrsqrt.pop %v394
    %v427 = vrsqrt.pop %v395
    %v428 = vrsqrt.pop %v396
    %v429 = vrsqrt.pop %v397
    %v430 = vrsqrt.pop %v398
    %v431 = vrsqrt.pop %v399
    %v432 = vrsqrt.pop %v400
    %v433 = vrsqrt.pop %v401
    %v434 = vrsqrt.pop %v402
    %v435 = vrsqrt.pop %v403
    %v436 = vrsqrt.pop %v404
    %v437 = vrsqrt.pop %v405
    %v438 = vrsqrt.pop %v406
    %v439 = vrsqrt.pop %v407
    %v440 = vrsqrt.pop %v408
    %v441 = vrsqrt.pop %v409
    %v442 = vrsqrt.pop %v410
    %v443 = vrsqrt.pop %v411
    %v444 = vrsqrt.pop %v412
    %v445 = vrsqrt.pop %v413
    %v446 = vrsqrt.pop %v414
    %v447 = vrsqrt.pop %v415
    %v448 = vmul.f32 %v192, %v416
    %v449 = vmul.f32 %v193, %v417
    %v450 = vmul.f32 %v194, %v418
    %v451 = vmul.f32 %v195, %v419
    %v452 = vmul.f32 %v196, %v420
    %v453 = vmul.f32 %v197, %v421
    %v454 = vmul.f32 %v198, %v422
    %v455 = vmul.f32 %v199, %v423
    %v456 = vmul.f32 %v200, %v424
    %v457 = vmul.f32 %v201, %v425
    %v458 = vmul.f32 %v202, %v426
    %v459 = vmul.f32 %v203, %v427
    %v460 = vmul.f32 %v204, %v428
    %v461 = vmul.f32 %v205, %v429
    %v462 = vmul.f32 %v206, %v430
    %v463 = vmul.f32 %v207, %v431
    %v464 = vmul.f32 %v208, %v432
    %v465 = vmul.f32 %v209, %v433
    %v466 = vmul.f32 %v210, %v434
    %v467 = vmul.f32 %v211, %v435
    %v468 = vmul.f32 %v212, %v436
    %v469 = vmul.f32 %v213, %v437
    %v470 = vmul.f32 %v214, %v438
    %v471 = vmul.f32 %v215, %v439
    %v472 = vmul.f32 %v216, %v440
    %v473 = vmul.f32 %v217, %v441
    %v474 = vmul.f32 %v218, %v442
    %v475 = vmul.f32 %v219, %v443
    %v476 = vmul.f32 %v220, %v444
    %v477 = vmul.f32 %v221, %v445
    %v478 = vmul.f32 %v222, %v446
    %v479 = vmul.f32 %v223, %v447
    %v480 = vlaneseq
    %v481 = vshrl.u32 %v480, 7
    %v482 = vsub.s32 0, %v481
    %v483 = vrot.slane %v61, %v482
    %v484 = vmul.f32 %v448, %v483
    %v485 = vmul.f32 %v449, %v483
    %v486 = vmul.f32 %v450, %v483
    %v487 = vmul.f32 %v451, %v483
    %v488 = vmul.f32 %v452, %v483
    %v489 = vmul.f32 %v453, %v483
    %v490 = vmul.f32 %v454, %v483
    %v491 = vmul.f32 %v455, %v483
    %v492 = vmul.f32 %v456, %v483
    %v493 = vmul.f32 %v457, %v483
    %v494 = vmul.f32 %v458, %v483
    %v495 = vmul.f32 %v459, %v483
    %v496 = vmul.f32 %v460, %v483
    %v497 = vmul.f32 %v461, %v483
    %v498 = vmul.f32 %v462, %v483
    %v499 = vmul.f32 %v463, %v483
    %v500 = vmul.f32 %v464, %v483
    %v501 = vmul.f32 %v465, %v483
    %v502 = vmul.f32 %v466, %v483
    %v503 = vmul.f32 %v467, %v483
    %v504 = vmul.f32 %v468, %v483
    %v505 = vmul.f32 %v469, %v483
    %v506 = vmul.f32 %v470, %v483
    %v507 = vmul.f32 %v471, %v483
    %v508 = vmul.f32 %v472, %v483
    %v509 = vmul.f32 %v473, %v483
    %v510 = vmul.f32 %v474, %v483
    %v511 = vmul.f32 %v475, %v483
    %v512 = vmul.f32 %v476, %v483
    %v513 = vmul.f32 %v477, %v483
    %v514 = vmul.f32 %v478, %v483
    %v515 = vmul.f32 %v479, %v483
    %v516 = vlaneseq
    %v517 = vshrl.u32 %v516, 7
    %v518 = vsub.s32 1, %v517
    %v519 = vrot.slane %v61, %v518
    %v520 = vadd.f32 %v484, %v519
    %v521 = vadd.f32 %v485, %v519
    %v522 = vadd.f32 %v486, %v519
    %v523 = vadd.f32 %v487, %v519
    %v524 = vadd.f32 %v488, %v519
    %v525 = vadd.f32 %v489, %v519
    %v526 = vadd.f32 %v490, %v519
    %v527 = vadd.f32 %v491, %v519
    %v528 = vadd.f32 %v492, %v519
    %v529 = vadd.f32 %v493, %v519
    %v530 = vadd.f32 %v494, %v519
    %v531 = vadd.f32 %v495, %v519
    %v532 = vadd.f32 %v496, %v519
    %v533 = vadd.f32 %v497, %v519
    %v534 = vadd.f32 %v498, %v519
    %v535 = vadd.f32 %v499, %v519
    %v536 = vadd.f32 %v500, %v519
    %v537 = vadd.f32 %v501, %v519
    %v538 = vadd.f32 %v502, %v519
    %v539 = vadd.f32 %v503, %v519
    %v540 = vadd.f32 %v504, %v519
    %v541 = vadd.f32 %v505, %v519
    %v542 = vadd.f32 %v506, %v519
    %v543 = vadd.f32 %v507, %v519
    %v544 = vadd.f32 %v508, %v519
    %v545 = vadd.f32 %v509, %v519
    %v546 = vadd.f32 %v510, %v519
    %v547 = vadd.f32 %v511, %v519
    %v548 = vadd.f32 %v512, %v519
    %v549 = vadd.f32 %v513, %v519
    %v550 = vadd.f32 %v514, %v519
    %v551 = vadd.f32 %v515, %v519
    %v552 = vld [vmem:[%s2] sm:$0x1]
    %v553 = vlaneseq
    %v554 = vshrl.u32 %v553, 7
    %v555 = vsub.s32 0, %v554
    %v556 = vrot.slane %v552, %v555
    %v557 = vmul.f32 %v520, %v556
    %v558 = vmul.f32 %v521, %v556
    %v559 = vmul.f32 %v522, %v556
    %v560 = vmul.f32 %v523, %v556
    %v561 = vmul.f32 %v524, %v556
    %v562 = vmul.f32 %v525, %v556
    %v563 = vmul.f32 %v526, %v556
    %v564 = vmul.f32 %v527, %v556
    %v565 = vmul.f32 %v528, %v556
    %v566 = vmul.f32 %v529, %v556
    %v567 = vmul.f32 %v530, %v556
    %v568 = vmul.f32 %v531, %v556
    %v569 = vmul.f32 %v532, %v556
    %v570 = vmul.f32 %v533, %v556
    %v571 = vmul.f32 %v534, %v556
    %v572 = vmul.f32 %v535, %v556
    %v573 = vmul.f32 %v536, %v556
    %v574 = vmul.f32 %v537, %v556
    %v575 = vmul.f32 %v538, %v556
    %v576 = vmul.f32 %v539, %v556
    %v577 = vmul.f32 %v540, %v556
    %v578 = vmul.f32 %v541, %v556
    %v579 = vmul.f32 %v542, %v556
    %v580 = vmul.f32 %v543, %v556
    %v581 = vmul.f32 %v544, %v556
    %v582 = vmul.f32 %v545, %v556
    %v583 = vmul.f32 %v546, %v556
    %v584 = vmul.f32 %v547, %v556
    %v585 = vmul.f32 %v548, %v556
    %v586 = vmul.f32 %v549, %v556
    %v587 = vmul.f32 %v550, %v556
    %v588 = vmul.f32 %v551, %v556
    %v589 = vsel %vm62, %v557, 0.0
    %590 = vadd.xlane.f32.xlu0 %v589
    %v591 = vpop.xlane.xlu0 %590
    %v592 = vsel %vm62, %v558, 0.0
    %593 = vadd.xlane.f32.xlu0 %v592
    %v594 = vpop.xlane.xlu0 %593
    %v595 = vsel %vm62, %v559, 0.0
    %596 = vadd.xlane.f32.xlu0 %v595
    %v597 = vpop.xlane.xlu0 %596
    %v598 = vsel %vm62, %v560, 0.0
    %599 = vadd.xlane.f32.xlu0 %v598
    %v600 = vpop.xlane.xlu0 %599
    %v601 = vsel %vm62, %v561, 0.0
    %602 = vadd.xlane.f32.xlu0 %v601
    %v603 = vpop.xlane.xlu0 %602
    %v604 = vsel %vm62, %v562, 0.0
    %605 = vadd.xlane.f32.xlu0 %v604
    %v606 = vpop.xlane.xlu0 %605
    %v607 = vsel %vm62, %v563, 0.0
    %608 = vadd.xlane.f32.xlu0 %v607
    %v609 = vpop.xlane.xlu0 %608
    %v610 = vsel %vm62, %v564, 0.0
    %611 = vadd.xlane.f32.xlu0 %v610
    %v612 = vpop.xlane.xlu0 %611
    %v613 = vsel %vm62, %v565, 0.0
    %614 = vadd.xlane.f32.xlu0 %v613
    %v615 = vpop.xlane.xlu0 %614
    %v616 = vsel %vm62, %v566, 0.0
    %617 = vadd.xlane.f32.xlu0 %v616
    %v618 = vpop.xlane.xlu0 %617
    %v619 = vsel %vm62, %v567, 0.0
    %620 = vadd.xlane.f32.xlu0 %v619
    %v621 = vpop.xlane.xlu0 %620
    %v622 = vsel %vm62, %v568, 0.0
    %623 = vadd.xlane.f32.xlu0 %v622
    %v624 = vpop.xlane.xlu0 %623
    %v625 = vsel %vm62, %v569, 0.0
    %626 = vadd.xlane.f32.xlu0 %v625
    %v627 = vpop.xlane.xlu0 %626
    %v628 = vsel %vm62, %v570, 0.0
    %629 = vadd.xlane.f32.xlu0 %v628
    %v630 = vpop.xlane.xlu0 %629
    %v631 = vsel %vm62, %v571, 0.0
    %632 = vadd.xlane.f32.xlu0 %v631
    %v633 = vpop.xlane.xlu0 %632
    %v634 = vsel %vm62, %v572, 0.0
    %635 = vadd.xlane.f32.xlu0 %v634
    %v636 = vpop.xlane.xlu0 %635
    %v637 = vsel %vm62, %v573, 0.0
    %638 = vadd.xlane.f32.xlu0 %v637
    %v639 = vpop.xlane.xlu0 %638
    %v640 = vsel %vm62, %v574, 0.0
    %641 = vadd.xlane.f32.xlu0 %v640
    %v642 = vpop.xlane.xlu0 %641
    %v643 = vsel %vm62, %v575, 0.0
    %644 = vadd.xlane.f32.xlu0 %v643
    %v645 = vpop.xlane.xlu0 %644
    %v646 = vsel %vm62, %v576, 0.0
    %647 = vadd.xlane.f32.xlu0 %v646
    %v648 = vpop.xlane.xlu0 %647
    %v649 = vsel %vm62, %v577, 0.0
    %650 = vadd.xlane.f32.xlu0 %v649
    %v651 = vpop.xlane.xlu0 %650
    %v652 = vsel %vm62, %v578, 0.0
    %653 = vadd.xlane.f32.xlu0 %v652
    %v654 = vpop.xlane.xlu0 %653
    %v655 = vsel %vm62, %v579, 0.0
    %656 = vadd.xlane.f32.xlu0 %v655
    %v657 = vpop.xlane.xlu0 %656
    %v658 = vsel %vm62, %v580, 0.0
    %659 = vadd.xlane.f32.xlu0 %v658
    %v660 = vpop.xlane.xlu0 %659
    %v661 = vsel %vm62, %v581, 0.0
    %662 = vadd.xlane.f32.xlu0 %v661
    %v663 = vpop.xlane.xlu0 %662
    %v664 = vsel %vm62, %v582, 0.0
    %665 = vadd.xlane.f32.xlu0 %v664
    %v666 = vpop.xlane.xlu0 %665
    %v667 = vsel %vm62, %v583, 0.0
    %668 = vadd.xlane.f32.xlu0 %v667
    %v669 = vpop.xlane.xlu0 %668
    %v670 = vsel %vm62, %v584, 0.0
    %671 = vadd.xlane.f32.xlu0 %v670
    %v672 = vpop.xlane.xlu0 %671
    %v673 = vsel %vm62, %v585, 0.0
    %674 = vadd.xlane.f32.xlu0 %v673
    %v675 = vpop.xlane.xlu0 %674
    %v676 = vsel %vm62, %v586, 0.0
    %677 = vadd.xlane.f32.xlu0 %v676
    %v678 = vpop.xlane.xlu0 %677
    %v679 = vsel %vm62, %v587, 0.0
    %680 = vadd.xlane.f32.xlu0 %v679
    %v681 = vpop.xlane.xlu0 %680
    %v682 = vsel %vm62, %v588, 0.0
    %683 = vadd.xlane.f32.xlu0 %v682
    %v684 = vpop.xlane.xlu0 %683
    %v717 = vlaneseq
    %v718 = vand.u32 %v717, 127
    %v719 = vlaneseq
    %v720 = vshrl.u32 %v719, 7
    %v721 = vsub.s32 %v718, %v720
    %v722 = vrot.slane %v591, %v721
    %v723 = vadd.s32 %v718, 4294967288
    %v724 = vlaneseq
    %v725 = vshrl.u32 %v724, 7
    %v726 = vsub.s32 %v723, %v725
    %v727 = vrot.slane %v594, %v726
    %vm728 = vcmask 130112
    %v729 = vsel %vm728, %v727, %v722
    %v730 = vlaneseq
    %v731 = vshrl.u32 %v730, 7
    %v732 = vsub.s32 %v718, %v731
    %v733 = vrot.slane %v597, %v732
    %v734 = vlaneseq
    %v735 = vshrl.u32 %v734, 7
    %v736 = vsub.s32 %v723, %v735
    %v737 = vrot.slane %v600, %v736
    %v738 = vsel %vm728, %v737, %v733
    %v739 = vlaneseq
    %v740 = vshrl.u32 %v739, 7
    %v741 = vsub.s32 %v718, %v740
    %v742 = vrot.slane %v603, %v741
    %v743 = vlaneseq
    %v744 = vshrl.u32 %v743, 7
    %v745 = vsub.s32 %v723, %v744
    %v746 = vrot.slane %v606, %v745
    %v747 = vsel %vm728, %v746, %v742
    %v748 = vlaneseq
    %v749 = vshrl.u32 %v748, 7
    %v750 = vsub.s32 %v718, %v749
    %v751 = vrot.slane %v609, %v750
    %v752 = vlaneseq
    %v753 = vshrl.u32 %v752, 7
    %v754 = vsub.s32 %v723, %v753
    %v755 = vrot.slane %v612, %v754
    %v756 = vsel %vm728, %v755, %v751
    %v757 = vlaneseq
    %v758 = vshrl.u32 %v757, 7
    %v759 = vsub.s32 %v718, %v758
    %v760 = vrot.slane %v615, %v759
    %v761 = vlaneseq
    %v762 = vshrl.u32 %v761, 7
    %v763 = vsub.s32 %v723, %v762
    %v764 = vrot.slane %v618, %v763
    %v765 = vsel %vm728, %v764, %v760
    %v766 = vlaneseq
    %v767 = vshrl.u32 %v766, 7
    %v768 = vsub.s32 %v718, %v767
    %v769 = vrot.slane %v621, %v768
    %v770 = vlaneseq
    %v771 = vshrl.u32 %v770, 7
    %v772 = vsub.s32 %v723, %v771
    %v773 = vrot.slane %v624, %v772
    %v774 = vsel %vm728, %v773, %v769
    %v775 = vlaneseq
    %v776 = vshrl.u32 %v775, 7
    %v777 = vsub.s32 %v718, %v776
    %v778 = vrot.slane %v627, %v777
    %v779 = vlaneseq
    %v780 = vshrl.u32 %v779, 7
    %v781 = vsub.s32 %v723, %v780
    %v782 = vrot.slane %v630, %v781
    %v783 = vsel %vm728, %v782, %v778
    %v784 = vlaneseq
    %v785 = vshrl.u32 %v784, 7
    %v786 = vsub.s32 %v718, %v785
    %v787 = vrot.slane %v633, %v786
    %v788 = vlaneseq
    %v789 = vshrl.u32 %v788, 7
    %v790 = vsub.s32 %v723, %v789
    %v791 = vrot.slane %v636, %v790
    %v792 = vsel %vm728, %v791, %v787
    %v793 = vlaneseq
    %v794 = vshrl.u32 %v793, 7
    %v795 = vsub.s32 %v718, %v794
    %v796 = vrot.slane %v639, %v795
    %v797 = vlaneseq
    %v798 = vshrl.u32 %v797, 7
    %v799 = vsub.s32 %v723, %v798
    %v800 = vrot.slane %v642, %v799
    %v801 = vsel %vm728, %v800, %v796
    %v802 = vlaneseq
    %v803 = vshrl.u32 %v802, 7
    %v804 = vsub.s32 %v718, %v803
    %v805 = vrot.slane %v645, %v804
    %v806 = vlaneseq
    %v807 = vshrl.u32 %v806, 7
    %v808 = vsub.s32 %v723, %v807
    %v809 = vrot.slane %v648, %v808
    %v810 = vsel %vm728, %v809, %v805
    %v811 = vlaneseq
    %v812 = vshrl.u32 %v811, 7
    %v813 = vsub.s32 %v718, %v812
    %v814 = vrot.slane %v651, %v813
    %v815 = vlaneseq
    %v816 = vshrl.u32 %v815, 7
    %v817 = vsub.s32 %v723, %v816
    %v818 = vrot.slane %v654, %v817
    %v819 = vsel %vm728, %v818, %v814
    %v820 = vlaneseq
    %v821 = vshrl.u32 %v820, 7
    %v822 = vsub.s32 %v718, %v821
    %v823 = vrot.slane %v657, %v822
    %v824 = vlaneseq
    %v825 = vshrl.u32 %v824, 7
    %v826 = vsub.s32 %v723, %v825
    %v827 = vrot.slane %v660, %v826
    %v828 = vsel %vm728, %v827, %v823
    %v829 = vlaneseq
    %v830 = vshrl.u32 %v829, 7
    %v831 = vsub.s32 %v718, %v830
    %v832 = vrot.slane %v663, %v831
    %v833 = vlaneseq
    %v834 = vshrl.u32 %v833, 7
    %v835 = vsub.s32 %v723, %v834
    %v836 = vrot.slane %v666, %v835
    %v837 = vsel %vm728, %v836, %v832
    %v838 = vlaneseq
    %v839 = vshrl.u32 %v838, 7
    %v840 = vsub.s32 %v718, %v839
    %v841 = vrot.slane %v669, %v840
    %v842 = vlaneseq
    %v843 = vshrl.u32 %v842, 7
    %v844 = vsub.s32 %v723, %v843
    %v845 = vrot.slane %v672, %v844
    %v846 = vsel %vm728, %v845, %v841
    %v847 = vlaneseq
    %v848 = vshrl.u32 %v847, 7
    %v849 = vsub.s32 %v718, %v848
    %v850 = vrot.slane %v675, %v849
    %v851 = vlaneseq
    %v852 = vshrl.u32 %v851, 7
    %v853 = vsub.s32 %v723, %v852
    %v854 = vrot.slane %v678, %v853
    %v855 = vsel %vm728, %v854, %v850
    %v856 = vlaneseq
    %v857 = vshrl.u32 %v856, 7
    %v858 = vsub.s32 %v718, %v857
    %v859 = vrot.slane %v681, %v858
    %v860 = vlaneseq
    %v861 = vshrl.u32 %v860, 7
    %v862 = vsub.s32 %v723, %v861
    %v863 = vrot.slane %v684, %v862
    %v864 = vsel %vm728, %v863, %v859
    %vm865 = vcmask 1041409
    %v866 = vsel %vm865, %v738, %v729
    %vm867 = vcmask 1042434
    %v868 = vsel %vm867, %v747, %v866
    %vm869 = vcmask 1043459
    %v870 = vsel %vm869, %v756, %v868
    %vm871 = vcmask 1044484
    %v872 = vsel %vm871, %v765, %v870
    %vm873 = vcmask 1045509
    %v874 = vsel %vm873, %v774, %v872
    %vm875 = vcmask 1046534
    %v876 = vsel %vm875, %v783, %v874
    %vm877 = vcmask 1047559
    %v878 = vsel %vm877, %v792, %v876
    %v879 = vsel %vm865, %v810, %v801
    %v880 = vsel %vm867, %v819, %v879
    %v881 = vsel %vm869, %v828, %v880
    %v882 = vsel %vm871, %v837, %v881
    %v883 = vsel %vm873, %v846, %v882
    %v884 = vsel %vm875, %v855, %v883
    %v885 = vsel %vm877, %v864, %v884
    %888 = vst.msk [vmem:[#allocation5] sm:$0xff] %vm62, %v878
    %889 = vst.msk [vmem:[#allocation5 + $0x8] sm:$0xff] %vm62, %v885
    %v890 = vld [vmem:[%s2 + $0x1] sm:$0x1]
    %v891 = vlaneseq
    %v892 = vshrl.u32 %v891, 7
    %v893 = vsub.s32 0, %v892
    %v894 = vrot.slane %v890, %v893
    %v895 = vmul.f32 %v520, %v894
    %v896 = vmul.f32 %v521, %v894
    %v897 = vmul.f32 %v522, %v894
    %v898 = vmul.f32 %v523, %v894
    %v899 = vmul.f32 %v524, %v894
    %v900 = vmul.f32 %v525, %v894
    %v901 = vmul.f32 %v526, %v894
    %v902 = vmul.f32 %v527, %v894
    %v903 = vmul.f32 %v528, %v894
    %v904 = vmul.f32 %v529, %v894
    %v905 = vmul.f32 %v530, %v894
    %v906 = vmul.f32 %v531, %v894
    %v907 = vmul.f32 %v532, %v894
    %v908 = vmul.f32 %v533, %v894
    %v909 = vmul.f32 %v534, %v894
    %v910 = vmul.f32 %v535, %v894
    %v911 = vmul.f32 %v536, %v894
    %v912 = vmul.f32 %v537, %v894
    %v913 = vmul.f32 %v538, %v894
    %v914 = vmul.f32 %v539, %v894
    %v915 = vmul.f32 %v540, %v894
    %v916 = vmul.f32 %v541, %v894
    %v917 = vmul.f32 %v542, %v894
    %v918 = vmul.f32 %v543, %v894
    %v919 = vmul.f32 %v544, %v894
    %v920 = vmul.f32 %v545, %v894
    %v921 = vmul.f32 %v546, %v894
    %v922 = vmul.f32 %v547, %v894
    %v923 = vmul.f32 %v548, %v894
    %v924 = vmul.f32 %v549, %v894
    %v925 = vmul.f32 %v550, %v894
    %v926 = vmul.f32 %v551, %v894
    %v927 = vsel %vm62, %v895, 0.0
    %928 = vadd.xlane.f32.xlu0 %v927
    %v929 = vpop.xlane.xlu0 %928
    %v930 = vsel %vm62, %v896, 0.0
    %931 = vadd.xlane.f32.xlu0 %v930
    %v932 = vpop.xlane.xlu0 %931
    %v933 = vsel %vm62, %v897, 0.0
    %934 = vadd.xlane.f32.xlu0 %v933
    %v935 = vpop.xlane.xlu0 %934
    %v936 = vsel %vm62, %v898, 0.0
    %937 = vadd.xlane.f32.xlu0 %v936
    %v938 = vpop.xlane.xlu0 %937
    %v939 = vsel %vm62, %v899, 0.0
    %940 = vadd.xlane.f32.xlu0 %v939
    %v941 = vpop.xlane.xlu0 %940
    %v942 = vsel %vm62, %v900, 0.0
    %943 = vadd.xlane.f32.xlu0 %v942
    %v944 = vpop.xlane.xlu0 %943
    %v945 = vsel %vm62, %v901, 0.0
    %946 = vadd.xlane.f32.xlu0 %v945
    %v947 = vpop.xlane.xlu0 %946
    %v948 = vsel %vm62, %v902, 0.0
    %949 = vadd.xlane.f32.xlu0 %v948
    %v950 = vpop.xlane.xlu0 %949
    %v951 = vsel %vm62, %v903, 0.0
    %952 = vadd.xlane.f32.xlu0 %v951
    %v953 = vpop.xlane.xlu0 %952
    %v954 = vsel %vm62, %v904, 0.0
    %955 = vadd.xlane.f32.xlu0 %v954
    %v956 = vpop.xlane.xlu0 %955
    %v957 = vsel %vm62, %v905, 0.0
    %958 = vadd.xlane.f32.xlu0 %v957
    %v959 = vpop.xlane.xlu0 %958
    %v960 = vsel %vm62, %v906, 0.0
    %961 = vadd.xlane.f32.xlu0 %v960
    %v962 = vpop.xlane.xlu0 %961
    %v963 = vsel %vm62, %v907, 0.0
    %964 = vadd.xlane.f32.xlu0 %v963
    %v965 = vpop.xlane.xlu0 %964
    %v966 = vsel %vm62, %v908, 0.0
    %967 = vadd.xlane.f32.xlu0 %v966
    %v968 = vpop.xlane.xlu0 %967
    %v969 = vsel %vm62, %v909, 0.0
    %970 = vadd.xlane.f32.xlu0 %v969
    %v971 = vpop.xlane.xlu0 %970
    %v972 = vsel %vm62, %v910, 0.0
    %973 = vadd.xlane.f32.xlu0 %v972
    %v974 = vpop.xlane.xlu0 %973
    %v975 = vsel %vm62, %v911, 0.0
    %976 = vadd.xlane.f32.xlu0 %v975
    %v977 = vpop.xlane.xlu0 %976
    %v978 = vsel %vm62, %v912, 0.0
    %979 = vadd.xlane.f32.xlu0 %v978
    %v980 = vpop.xlane.xlu0 %979
    %v981 = vsel %vm62, %v913, 0.0
    %982 = vadd.xlane.f32.xlu0 %v981
    %v983 = vpop.xlane.xlu0 %982
    %v984 = vsel %vm62, %v914, 0.0
    %985 = vadd.xlane.f32.xlu0 %v984
    %v986 = vpop.xlane.xlu0 %985
    %v987 = vsel %vm62, %v915, 0.0
    %988 = vadd.xlane.f32.xlu0 %v987
    %v989 = vpop.xlane.xlu0 %988
    %v990 = vsel %vm62, %v916, 0.0
    %991 = vadd.xlane.f32.xlu0 %v990
    %v992 = vpop.xlane.xlu0 %991
    %v993 = vsel %vm62, %v917, 0.0
    %994 = vadd.xlane.f32.xlu0 %v993
    %v995 = vpop.xlane.xlu0 %994
    %v996 = vsel %vm62, %v918, 0.0
    %997 = vadd.xlane.f32.xlu0 %v996
    %v998 = vpop.xlane.xlu0 %997
    %v999 = vsel %vm62, %v919, 0.0
    %1000 = vadd.xlane.f32.xlu0 %v999
    %v1001 = vpop.xlane.xlu0 %1000
    %v1002 = vsel %vm62, %v920, 0.0
    %1003 = vadd.xlane.f32.xlu0 %v1002
    %v1004 = vpop.xlane.xlu0 %1003
    %v1005 = vsel %vm62, %v921, 0.0
    %1006 = vadd.xlane.f32.xlu0 %v1005
    %v1007 = vpop.xlane.xlu0 %1006
    %v1008 = vsel %vm62, %v922, 0.0
    %1009 = vadd.xlane.f32.xlu0 %v1008
    %v1010 = vpop.xlane.xlu0 %1009
    %v1011 = vsel %vm62, %v923, 0.0
    %1012 = vadd.xlane.f32.xlu0 %v1011
    %v1013 = vpop.xlane.xlu0 %1012
    %v1014 = vsel %vm62, %v924, 0.0
    %1015 = vadd.xlane.f32.xlu0 %v1014
    %v1016 = vpop.xlane.xlu0 %1015
    %v1017 = vsel %vm62, %v925, 0.0
    %1018 = vadd.xlane.f32.xlu0 %v1017
    %v1019 = vpop.xlane.xlu0 %1018
    %v1020 = vsel %vm62, %v926, 0.0
    %1021 = vadd.xlane.f32.xlu0 %v1020
    %v1022 = vpop.xlane.xlu0 %1021
    %v1055 = vlaneseq
    %v1056 = vshrl.u32 %v1055, 7
    %v1057 = vsub.s32 %v718, %v1056
    %v1058 = vrot.slane %v929, %v1057
    %v1059 = vlaneseq
    %v1060 = vshrl.u32 %v1059, 7
    %v1061 = vsub.s32 %v723, %v1060
    %v1062 = vrot.slane %v932, %v1061
    %v1063 = vsel %vm728, %v1062, %v1058
    %v1064 = vlaneseq
    %v1065 = vshrl.u32 %v1064, 7
    %v1066 = vsub.s32 %v718, %v1065
    %v1067 = vrot.slane %v935, %v1066
    %v1068 = vlaneseq
    %v1069 = vshrl.u32 %v1068, 7
    %v1070 = vsub.s32 %v723, %v1069
    %v1071 = vrot.slane %v938, %v1070
    %v1072 = vsel %vm728, %v1071, %v1067
    %v1073 = vlaneseq
    %v1074 = vshrl.u32 %v1073, 7
    %v1075 = vsub.s32 %v718, %v1074
    %v1076 = vrot.slane %v941, %v1075
    %v1077 = vlaneseq
    %v1078 = vshrl.u32 %v1077, 7
    %v1079 = vsub.s32 %v723, %v1078
    %v1080 = vrot.slane %v944, %v1079
    %v1081 = vsel %vm728, %v1080, %v1076
    %v1082 = vlaneseq
    %v1083 = vshrl.u32 %v1082, 7
    %v1084 = vsub.s32 %v718, %v1083
    %v1085 = vrot.slane %v947, %v1084
    %v1086 = vlaneseq
    %v1087 = vshrl.u32 %v1086, 7
    %v1088 = vsub.s32 %v723, %v1087
    %v1089 = vrot.slane %v950, %v1088
    %v1090 = vsel %vm728, %v1089, %v1085
    %v1091 = vlaneseq
    %v1092 = vshrl.u32 %v1091, 7
    %v1093 = vsub.s32 %v718, %v1092
    %v1094 = vrot.slane %v953, %v1093
    %v1095 = vlaneseq
    %v1096 = vshrl.u32 %v1095, 7
    %v1097 = vsub.s32 %v723, %v1096
    %v1098 = vrot.slane %v956, %v1097
    %v1099 = vsel %vm728, %v1098, %v1094
    %v1100 = vlaneseq
    %v1101 = vshrl.u32 %v1100, 7
    %v1102 = vsub.s32 %v718, %v1101
    %v1103 = vrot.slane %v959, %v1102
    %v1104 = vlaneseq
    %v1105 = vshrl.u32 %v1104, 7
    %v1106 = vsub.s32 %v723, %v1105
    %v1107 = vrot.slane %v962, %v1106
    %v1108 = vsel %vm728, %v1107, %v1103
    %v1109 = vlaneseq
    %v1110 = vshrl.u32 %v1109, 7
    %v1111 = vsub.s32 %v718, %v1110
    %v1112 = vrot.slane %v965, %v1111
    %v1113 = vlaneseq
    %v1114 = vshrl.u32 %v1113, 7
    %v1115 = vsub.s32 %v723, %v1114
    %v1116 = vrot.slane %v968, %v1115
    %v1117 = vsel %vm728, %v1116, %v1112
    %v1118 = vlaneseq
    %v1119 = vshrl.u32 %v1118, 7
    %v1120 = vsub.s32 %v718, %v1119
    %v1121 = vrot.slane %v971, %v1120
    %v1122 = vlaneseq
    %v1123 = vshrl.u32 %v1122, 7
    %v1124 = vsub.s32 %v723, %v1123
    %v1125 = vrot.slane %v974, %v1124
    %v1126 = vsel %vm728, %v1125, %v1121
    %v1127 = vlaneseq
    %v1128 = vshrl.u32 %v1127, 7
    %v1129 = vsub.s32 %v718, %v1128
    %v1130 = vrot.slane %v977, %v1129
    %v1131 = vlaneseq
    %v1132 = vshrl.u32 %v1131, 7
    %v1133 = vsub.s32 %v723, %v1132
    %v1134 = vrot.slane %v980, %v1133
    %v1135 = vsel %vm728, %v1134, %v1130
    %v1136 = vlaneseq
    %v1137 = vshrl.u32 %v1136, 7
    %v1138 = vsub.s32 %v718, %v1137
    %v1139 = vrot.slane %v983, %v1138
    %v1140 = vlaneseq
    %v1141 = vshrl.u32 %v1140, 7
    %v1142 = vsub.s32 %v723, %v1141
    %v1143 = vrot.slane %v986, %v1142
    %v1144 = vsel %vm728, %v1143, %v1139
    %v1145 = vlaneseq
    %v1146 = vshrl.u32 %v1145, 7
    %v1147 = vsub.s32 %v718, %v1146
    %v1148 = vrot.slane %v989, %v1147
    %v1149 = vlaneseq
    %v1150 = vshrl.u32 %v1149, 7
    %v1151 = vsub.s32 %v723, %v1150
    %v1152 = vrot.slane %v992, %v1151
    %v1153 = vsel %vm728, %v1152, %v1148
    %v1154 = vlaneseq
    %v1155 = vshrl.u32 %v1154, 7
    %v1156 = vsub.s32 %v718, %v1155
    %v1157 = vrot.slane %v995, %v1156
    %v1158 = vlaneseq
    %v1159 = vshrl.u32 %v1158, 7
    %v1160 = vsub.s32 %v723, %v1159
    %v1161 = vrot.slane %v998, %v1160
    %v1162 = vsel %vm728, %v1161, %v1157
    %v1163 = vlaneseq
    %v1164 = vshrl.u32 %v1163, 7
    %v1165 = vsub.s32 %v718, %v1164
    %v1166 = vrot.slane %v1001, %v1165
    %v1167 = vlaneseq
    %v1168 = vshrl.u32 %v1167, 7
    %v1169 = vsub.s32 %v723, %v1168
    %v1170 = vrot.slane %v1004, %v1169
    %v1171 = vsel %vm728, %v1170, %v1166
    %v1172 = vlaneseq
    %v1173 = vshrl.u32 %v1172, 7
    %v1174 = vsub.s32 %v718, %v1173
    %v1175 = vrot.slane %v1007, %v1174
    %v1176 = vlaneseq
    %v1177 = vshrl.u32 %v1176, 7
    %v1178 = vsub.s32 %v723, %v1177
    %v1179 = vrot.slane %v1010, %v1178
    %v1180 = vsel %vm728, %v1179, %v1175
    %v1181 = vlaneseq
    %v1182 = vshrl.u32 %v1181, 7
    %v1183 = vsub.s32 %v718, %v1182
    %v1184 = vrot.slane %v1013, %v1183
    %v1185 = vlaneseq
    %v1186 = vshrl.u32 %v1185, 7
    %v1187 = vsub.s32 %v723, %v1186
    %v1188 = vrot.slane %v1016, %v1187
    %v1189 = vsel %vm728, %v1188, %v1184
    %v1190 = vlaneseq
    %v1191 = vshrl.u32 %v1190, 7
    %v1192 = vsub.s32 %v718, %v1191
    %v1193 = vrot.slane %v1019, %v1192
    %v1194 = vlaneseq
    %v1195 = vshrl.u32 %v1194, 7
    %v1196 = vsub.s32 %v723, %v1195
    %v1197 = vrot.slane %v1022, %v1196
    %v1198 = vsel %vm728, %v1197, %v1193
    %v1199 = vsel %vm865, %v1072, %v1063
    %v1200 = vsel %vm867, %v1081, %v1199
    %v1201 = vsel %vm869, %v1090, %v1200
    %v1202 = vsel %vm871, %v1099, %v1201
    %v1203 = vsel %vm873, %v1108, %v1202
    %v1204 = vsel %vm875, %v1117, %v1203
    %v1205 = vsel %vm877, %v1126, %v1204
    %v1206 = vsel %vm865, %v1144, %v1135
    %v1207 = vsel %vm867, %v1153, %v1206
    %v1208 = vsel %vm869, %v1162, %v1207
    %v1209 = vsel %vm871, %v1171, %v1208
    %v1210 = vsel %vm873, %v1180, %v1209
    %v1211 = vsel %vm875, %v1189, %v1210
    %v1212 = vsel %vm877, %v1198, %v1211
    %s1215 = scalar_lea.vmem [#allocation5], 16
    %1216 = vst.msk [vmem:[%s1215] sm:$0xff] %vm62, %v1205
    %1217 = vst.msk [vmem:[%s1215 + $0x8] sm:$0xff] %vm62, %v1212
    // Predicated region
    $region18: #{tpu_custom_call.1} parent=1 // pred_check
      _
    $region19: #{tpu_custom_call.1} parent=1 // pred_check_branch
      %1219 = sbr.rel (0) target = $region21
    $region20: #{tpu_custom_call.1} parent=1 // pred_region
      %s1221 = ssub.s32 512, 512
      %1222 = vsyncadd [#allocation4], %s1221
      %s1223 = sshll.u32 [#allocation5], 4
      %s1224 = int_to_ptr.vmem [resolvable:$true] %s1223
      %1229 = dma.vmem_to_hbm [thread:$0]  %s1224, 512, %s3, [#allocation4], 128, 128, 8
    $region21: #{tpu_custom_call.1} parent=1 // pred_fallthru
      _
    // Predicated region
    $region22: #{tpu_custom_call.1} parent=1 // pred_check
      _
    $region23: #{tpu_custom_call.1} parent=1 // pred_check_branch
      %1231 = sbr.rel (0) target = $region25
    $region24: #{tpu_custom_call.1} parent=1 // pred_region
      %1232 = dma.done [#allocation4], 512
    $region25: #{tpu_custom_call.1} parent=1 // pred_fallthru
      _
    %1233 = vsyncpa [#allocation3], 1
    %1234 = vsyncpa [#allocation4], 1

</llo_original>
